<compile_context>
chip_gen: v5e
topology: v5e:2x2
jax: 0.10.0
libtpu: 0.0.40
codegen_flags: <defaults>
</compile_context>

<pallas_src>
import jax
import jax.numpy as jnp
from jax.experimental import pallas as pl
from jax.experimental.pallas import tpu as pltpu


def mlp_kernel(x_ref, w1_ref, b1_ref, w2_ref, b2_ref, o_ref):
    # hidden = relu(x @ W1 + b1)          (MXU matmul, f32 accumulation)
    h = jnp.dot(x_ref[...], w1_ref[...], preferred_element_type=jnp.float32)
    h = jnp.maximum(h + b1_ref[...], 0.0)                 # (tb, H) + (1, H)
    # out = sigmoid(<h, w2> + b2)         (VPU multiply + XLU lane reduce)
    z = jnp.sum(h * w2_ref[...], axis=-1, keepdims=True)  # (tb, 1)
    z = z + b2_ref[...]                                   # (tb, 1) + (1, 1)
    o_ref[...] = jax.nn.sigmoid(z).astype(o_ref.dtype)


def _round_up(n, m):
    return ((n + m - 1) // m) * m


def _choose_batch_tile(B, in_features, hidden, block_b):
    """Pick the batch tile: multiple of 8, fits a conservative VMEM budget,
    >=2 grid steps for large batches (v7x dual TensorCore), and dividing the
    8-aligned batch exactly when possible so no jnp.pad copy is needed."""
    B8 = _round_up(B, 8)

    # Conservative budget; v7x (64 MiB physical VMEM) is the binding generation.
    budget = 40 * 1024 * 1024
    # Single-buffered weights + double-buffered x tile + hidden activations +
    # double-buffered (tb, 1) output tile.
    weight_bytes = 4 * (in_features * hidden + hidden + hidden + 1)
    per_row = 4 * (2 * in_features + hidden + 2)
    cap = max(8, ((budget - weight_bytes) // per_row // 8) * 8)
    tb_max = min(block_b, cap, B8)

    # v7x: ensure >=2 grid steps to shard across both TensorCores, unless the
    # batch is small enough that per-step overhead (~0.35us) would dominate.
    min_steps = 2 if B8 >= 512 else 1
    n = max(min_steps, pl.cdiv(B8, tb_max))

    # Prefer a tile count whose tile divides B8 exactly (avoids padding x).
    for cand in range(n, min(n + 16, B8 // 8 + 1)):
        if B8 % cand == 0 and (B8 // cand) % 8 == 0:
            return B8 // cand
    return min(tb_max, _round_up(pl.cdiv(B8, n), 8))


def neural_net_forward(x, w1, b1, w2, b2, *, block_b=4096, use_bf16=False):
    """x: (B, in) f32; w1: (in, hidden); b1: (1, hidden); w2: (hidden, 1);
    b2: (1, 1).  Returns (B, 1) f32 = sigmoid(relu(x@w1+b1) @ w2 + b2)."""
    B, in_features = x.shape
    hidden = w1.shape[1]

    tb = _choose_batch_tile(B, in_features, hidden, block_b)
    Bp = _round_up(B, tb)
    if Bp != B:  # only the <=7-row 8-alignment tail in the common case
        x = jnp.pad(x, ((0, Bp - B), (0, 0)))

    # Layer-2 weight as a lane-dense row for the in-kernel VPU reduce.
    w2_row = w2.reshape(1, hidden).astype(jnp.float32)
    b2 = b2.reshape(1, 1).astype(jnp.float32)

    if use_bf16:
        # Opt-in MXU-throughput path for compute-bound shapes (breaks 1e-5 tol).
        x = x.astype(jnp.bfloat16)
        w1 = w1.astype(jnp.bfloat16)

    resident = pl.Buffered(1)  # constant index_map -> single buffer is enough

    out = pl.pallas_call(
        mlp_kernel,
        out_shape=jax.ShapeDtypeStruct((Bp, 1), jnp.float32),
        grid_spec=pltpu.PrefetchScalarGridSpec(
            num_scalar_prefetch=0,
            grid=(Bp // tb,),
            in_specs=[
                pl.BlockSpec((tb, in_features), lambda i: (i, 0)),   # x: batch-tiled
                pl.BlockSpec((in_features, hidden), lambda i: (0, 0),
                             pipeline_mode=resident),                # W1 resident
                pl.BlockSpec((1, hidden), lambda i: (0, 0),
                             pipeline_mode=resident),                # b1 resident
                pl.BlockSpec((1, hidden), lambda i: (0, 0),
                             pipeline_mode=resident),                # w2 row resident
                pl.BlockSpec((1, 1), lambda i: (0, 0),
                             pipeline_mode=resident),                # b2 resident
            ],
            out_specs=pl.BlockSpec((tb, 1), lambda i: (i, 0)),       # narrow output
        ),
        compiler_params=pltpu.CompilerParams(
            dimension_semantics=("parallel",),   # batch tiles independent
            vmem_limit_bytes=48 * 1024 * 1024,
        ),
    )(x, w1, b1, w2_row, b2)

    return out[:B]  # drop the (at most 7-row) batch padding


def init_params(key, input_size, hidden_size):
    """Deterministic init mimicking PyTorch nn.Linear (uniform +/- 1/sqrt(fan_in))."""
    k1, k2, k3, k4 = jax.random.split(key, 4)
    bound1 = 1.0 / jnp.sqrt(input_size)
    bound2 = 1.0 / jnp.sqrt(hidden_size)
    # Stored as (in_features, out_features) == PyTorch weight.T
    w1 = jax.random.uniform(k1, (input_size, hidden_size), jnp.float32, -bound1, bound1)
    b1 = jax.random.uniform(k2, (1, hidden_size), jnp.float32, -bound1, bound1)
    w2 = jax.random.uniform(k3, (hidden_size, 1), jnp.float32, -bound2, bound2)
    b2 = jax.random.uniform(k4, (1, 1), jnp.float32, -bound2, bound2)
    return w1, b1, w2, b2


def _reference(x, w1, b1, w2, b2):
    return jax.nn.sigmoid(jnp.maximum(x @ w1 + b1, 0.0) @ w2 + b2)


if __name__ == "__main__":
    key = jax.random.PRNGKey(0)
    input_size, hidden_size = 16, 32
    kx, kp, kx2 = jax.random.split(key, 3)
    w1, b1, w2, b2 = init_params(kp, input_size, hidden_size)

    # Small, module-consistent shape (single tile).
    x = jax.random.normal(kx, (8, input_size), jnp.float32)
    out = jax.block_until_ready(neural_net_forward(x, w1, b1, w2, b2))
    ref = _reference(x, w1, b1, w2, b2)
    assert out.shape == (8, 1)
    assert jnp.allclose(out, ref, atol=1e-5, rtol=1e-5)

    # Larger batch: exercises the multi-tile (>=2 grid step) path.
    x2 = jax.random.normal(kx2, (520, input_size), jnp.float32)
    out2 = jax.block_until_ready(neural_net_forward(x2, w1, b1, w2, b2))
    ref2 = _reference(x2, w1, b1, w2, b2)
    assert out2.shape == (520, 1)
    assert jnp.allclose(out2, ref2, atol=1e-5, rtol=1e-5)

    print("KERNEL_OK")
</pallas_src>

<mosaic_0001>
module attributes {stable_mosaic.version = 11 : i64} {
  func.func @mlp_kernel(%arg0: i32, %arg1: memref<8x16xf32, #tpu.memory_space<vmem>>, %arg2: memref<16x32xf32, #tpu.memory_space<vmem>>, %arg3: memref<1x32xf32, #tpu.memory_space<vmem>>, %arg4: memref<1x32xf32, #tpu.memory_space<vmem>>, %arg5: memref<1x1xf32, #tpu.memory_space<vmem>>, %arg6: memref<8x1xf32, #tpu.memory_space<vmem>>) attributes {dimension_semantics = [#tpu.dimension_semantics<parallel>], iteration_bounds = array<i64: 1>, scalar_prefetch = 0 : i64, scratch_operands = 0 : i64, tpu.core_type = #tpu.core_type<tc>, window_params = [{transform_indices = @transform_0, window_bounds = array<i64: 8, 16>}, {pipeline_mode = #tpu.pipeline_mode<synchronous>, transform_indices = @transform_1, window_bounds = array<i64: 16, 32>}, {pipeline_mode = #tpu.pipeline_mode<synchronous>, transform_indices = @transform_2, window_bounds = array<i64: 1, 32>}, {pipeline_mode = #tpu.pipeline_mode<synchronous>, transform_indices = @transform_3, window_bounds = array<i64: 1, 32>}, {pipeline_mode = #tpu.pipeline_mode<synchronous>, transform_indices = @transform_4, window_bounds = array<i64: 1, 1>}, {transform_indices = @transform_5, window_bounds = array<i64: 8, 1>}]} {
    %c0 = arith.constant 0 : index
    %c0_0 = arith.constant 0 : index
    %0 = vector.load %arg1[%c0, %c0_0] : memref<8x16xf32, #tpu.memory_space<vmem>>, vector<8x16xf32>
    %c0_1 = arith.constant 0 : index
    %c0_2 = arith.constant 0 : index
    %1 = vector.load %arg2[%c0_1, %c0_2] : memref<16x32xf32, #tpu.memory_space<vmem>>, vector<16x32xf32>
    %cst = arith.constant dense<0.000000e+00> : vector<8x32xf32>
    %2 = tpu.matmul %0, %1, %cst {dimension_numbers = #tpu.dot_dimension_numbers<[1], [0], [0], [1], [0, 0, 1, 1], [], []>} : vector<8x16xf32>, vector<16x32xf32>, vector<8x32xf32> -> vector<8x32xf32>
    %c0_3 = arith.constant 0 : index
    %c0_4 = arith.constant 0 : index
    %3 = vector.load %arg3[%c0_3, %c0_4] : memref<1x32xf32, #tpu.memory_space<vmem>>, vector<1x32xf32>
    %4 = vector.broadcast %3 : vector<1x32xf32> to vector<8x32xf32>
    %5 = arith.addf %2, %4 : vector<8x32xf32>
    %cst_5 = arith.constant 0.000000e+00 : f32
    %6 = vector.broadcast %cst_5 : f32 to vector<8x32xf32>
    %7 = arith.maximumf %5, %6 : vector<8x32xf32>
    %c0_6 = arith.constant 0 : index
    %c0_7 = arith.constant 0 : index
    %8 = vector.load %arg4[%c0_6, %c0_7] : memref<1x32xf32, #tpu.memory_space<vmem>>, vector<1x32xf32>
    %9 = vector.broadcast %8 : vector<1x32xf32> to vector<8x32xf32>
    %10 = arith.mulf %7, %9 : vector<8x32xf32>
    %cst_8 = arith.constant dense<0.000000e+00> : vector<8xf32>
    %11 = vector.multi_reduction <add>, %10, %cst_8 [1] : vector<8x32xf32> to vector<8xf32>
    %12 = vector.shape_cast %11 : vector<8xf32> to vector<8x1xf32>
    %c0_9 = arith.constant 0 : index
    %c0_10 = arith.constant 0 : index
    %13 = vector.load %arg5[%c0_9, %c0_10] : memref<1x1xf32, #tpu.memory_space<vmem>>, vector<1x1xf32>
    %14 = vector.broadcast %13 : vector<1x1xf32> to vector<8x1xf32>
    %15 = arith.addf %12, %14 : vector<8x1xf32>
    %16 = arith.negf %15 : vector<8x1xf32>
    %17 = math.exp %16 : vector<8x1xf32>
    %cst_11 = arith.constant 1.000000e+00 : f32
    %18 = vector.broadcast %cst_11 : f32 to vector<8x1xf32>
    %19 = arith.addf %18, %17 : vector<8x1xf32>
    %20 = arith.divf %18, %19 : vector<8x1xf32>
    %c0_12 = arith.constant 0 : index
    %c0_13 = arith.constant 0 : index
    %21 = vector.load %arg6[%c0_12, %c0_13] : memref<8x1xf32, #tpu.memory_space<vmem>>, vector<8x1xf32>
    tpu.vector_store %arg6[%c0_12, %c0_13], %20 {strides = array<i32>} : memref<8x1xf32, #tpu.memory_space<vmem>>, vector<8x1xf32>,
    return
  }
  func.func @transform_0(%arg0: i32) -> (i32, i32) {
    %c0_i32 = arith.constant 0 : i32
    %c0_i32_0 = arith.constant 0 : i32
    return %arg0, %c0_i32 : i32, i32
  }
  func.func @transform_1(%arg0: i32) -> (i32, i32) {
    %c0_i32 = arith.constant 0 : i32
    %c0_i32_0 = arith.constant 0 : i32
    %c0_i32_1 = arith.constant 0 : i32
    return %c0_i32, %c0_i32_0 : i32, i32
  }
  func.func @transform_2(%arg0: i32) -> (i32, i32) {
    %c0_i32 = arith.constant 0 : i32
    %c0_i32_0 = arith.constant 0 : i32
    %c0_i32_1 = arith.constant 0 : i32
    return %c0_i32, %c0_i32_0 : i32, i32
  }
  func.func @transform_3(%arg0: i32) -> (i32, i32) {
    %c0_i32 = arith.constant 0 : i32
    %c0_i32_0 = arith.constant 0 : i32
    %c0_i32_1 = arith.constant 0 : i32
    return %c0_i32, %c0_i32_0 : i32, i32
  }
  func.func @transform_4(%arg0: i32) -> (i32, i32) {
    %c0_i32 = arith.constant 0 : i32
    %c0_i32_0 = arith.constant 0 : i32
    %c0_i32_1 = arith.constant 0 : i32
    return %c0_i32, %c0_i32_0 : i32, i32
  }
  func.func @transform_5(%arg0: i32) -> (i32, i32) {
    %c0_i32 = arith.constant 0 : i32
    %c0_i32_0 = arith.constant 0 : i32
    return %arg0, %c0_i32 : i32, i32
  }
}

</mosaic_0001>

<llo_original>
// kernel: tpu_custom_call.1
$region0: #{tpu_custom_call.1}
  #allocation0 [shape = 'u32[]', space=smem, size = 0x4, offset = 0x4, fixed_abs, tag = 'smem constant byte address 0x4 - core index']
  #allocation1 [shape = 'u32[72,128]{1,0:T(1,128)}', space=vmem, size = 0x9000, scoped, tag = 'internal scratch']
  #allocation2 [shape = 'f32[1,1]{1,0:T(1,128)S(1)}', space=vmem, size = 0x200, scoped, tag = 'scoped memory for tpu_custom_call.1']
  %s0 = inlined_call_operand.hbm [shape: f32[8,16], index: 0, kind: input, shape index: {}]
  %s1 = inlined_call_operand.hbm [shape: f32[16,32], index: 1, kind: input, shape index: {}]
  %s2 = inlined_call_operand.vmem [shape: f32[1,32], index: 2, kind: input, shape index: {}]
  %s3 = inlined_call_operand.vmem [shape: f32[1,32], index: 3, kind: input, shape index: {}]
  %s4 = inlined_call_operand.<no memory space> [shape: f32[1,1], index: 4, kind: input, shape index: {}]
  %s5 = inlined_call_operand.vmem [shape: f32[8,1], index: 5, kind: output, shape index: {}]
  %s6 = sld [smem:[#allocation0]]
  $region38: #{tpu_custom_call.1} parent=0
    _
  %s8 = ssub.s32 1, %s6
  %s9 = scalar_select 0, %s8, %s6
  %v10 = vstv %s4
  %11 = vst [vmem:[#allocation2] sm:$0x1] %v10
  $region1: #{tpu_custom_call.1} parent=0
    #allocation3 [shape = 'u8[4096]{0}', space=vmem, size = 0x1000, scoped, tag = 'input window, operand 0, single buffered']
    #allocation4 [shape = 's32[1]{0}', space=sflag, size = 0x4, scoped, tag = 'scoped memory for tpu_custom_call.1']
    #allocation5 [shape = 'u8[8192]{0}', space=vmem, size = 0x2000, scoped, tag = 'input window, operand 1, single buffered']
    #allocation6 [shape = 's32[1]{0}', space=sflag, size = 0x4, scoped, tag = 'scoped memory for tpu_custom_call.1']
    %12 = vsyncpa [#allocation4], 0
    %13 = vsyncpa [#allocation6], 0
    // Predicated region
    $region2: #{tpu_custom_call.1} parent=1 // pred_check
      _
    $region3: #{tpu_custom_call.1} parent=1 // pred_check_branch
      %15 = sbr.rel (0) target = $region5
    $region4: #{tpu_custom_call.1} parent=1 // pred_region
      %17 = vsyncadd [#allocation4], 0
      %s19 = sshll.u32 %s0, 4
      %s20 = int_to_ptr.hbm [resolvable:$true] %s19
      %s21 = sshll.u32 [#allocation3], 4
      %s22 = int_to_ptr.vmem [resolvable:$true] %s21
      %24 = dma.hbm_to_vmem [thread:$0]  %s20, 128, %s22, [#allocation4]
    $region5: #{tpu_custom_call.1} parent=1 // pred_fallthru
      _
    // Predicated region
    $region6: #{tpu_custom_call.1} parent=1 // pred_check
      _
    $region7: #{tpu_custom_call.1} parent=1 // pred_check_branch
      %26 = sbr.rel (0) target = $region9
    $region8: #{tpu_custom_call.1} parent=1 // pred_region
      %28 = vsyncadd [#allocation6], 0
      %s29 = sshll.u32 %s1, 4
      %s30 = int_to_ptr.hbm [resolvable:$true] %s29
      %s31 = sshll.u32 [#allocation5], 4
      %s32 = int_to_ptr.vmem [resolvable:$true] %s31
      %37 = dma.hbm_to_vmem [thread:$0]  %s30, 256, %s32, [#allocation6], 128, 128, 8
    $region9: #{tpu_custom_call.1} parent=1 // pred_fallthru
      _
    // Predicated region
    $region10: #{tpu_custom_call.1} parent=1 // pred_check
      _
    $region11: #{tpu_custom_call.1} parent=1 // pred_check_branch
      %39 = sbr.rel (0) target = $region13
    $region12: #{tpu_custom_call.1} parent=1 // pred_region
      _
    $region13: #{tpu_custom_call.1} parent=1 // pred_fallthru
      _
    // Predicated region
    $region14: #{tpu_custom_call.1} parent=1 // pred_check
      _
    $region15: #{tpu_custom_call.1} parent=1 // pred_check_branch
      %41 = sbr.rel (0) target = $region17
    $region16: #{tpu_custom_call.1} parent=1 // pred_region
      _
    $region17: #{tpu_custom_call.1} parent=1 // pred_fallthru
      _
    // Predicated region
    $region18: #{tpu_custom_call.1} parent=1 // pred_check
      _
    $region19: #{tpu_custom_call.1} parent=1 // pred_check_branch
      %43 = sbr.rel (0) target = $region21
    $region20: #{tpu_custom_call.1} parent=1 // pred_region
      _
    $region21: #{tpu_custom_call.1} parent=1 // pred_fallthru
      _
    // Predicated region
    $region22: #{tpu_custom_call.1} parent=1 // pred_check
      _
    $region23: #{tpu_custom_call.1} parent=1 // pred_check_branch
      %45 = sbr.rel (0) target = $region25
    $region24: #{tpu_custom_call.1} parent=1 // pred_region
      %47 = dma.done [#allocation4], 128
    $region25: #{tpu_custom_call.1} parent=1 // pred_fallthru
      _
    // Predicated region
    $region26: #{tpu_custom_call.1} parent=1 // pred_check
      _
    $region27: #{tpu_custom_call.1} parent=1 // pred_check_branch
      %49 = sbr.rel (0) target = $region29
    $region28: #{tpu_custom_call.1} parent=1 // pred_region
      %51 = dma.done [#allocation6], 256
    $region29: #{tpu_custom_call.1} parent=1 // pred_fallthru
      _
    %v52 = vld [vmem:[#allocation3] sm:$0xff]
    %v53 = vld [vmem:[#allocation5] sm:$0xff]
    %v54 = vld [vmem:[#allocation5 + $0x8] sm:$0xff]
    %v55 = vld [vmem:[%s2] sm:$0x1]
    %v57 = vperm.slane %v55, 0
    %vm59 = vcmask 130048
    %v61 = vsel %vm59, %v52, 0
    %63 = vmatpush.msra.mxu0 0.0
    %64 = vmatpush.msra.mxu0 0.0
    %65 = vmatpush.msra.mxu0 0.0
    %66 = vmatpush.msra.mxu0 0.0
    %67 = vmatpush.msra.mxu0 0.0
    %68 = vmatpush.msra.mxu0 0.0
    %69 = vmatpush.msra.mxu0 0.0
    %70 = vmatpush.msra.mxu0 0.0
    %71 = vmatpush.msra.mxu0 0.0
    %72 = vmatpush.msra.mxu0 0.0
    %73 = vmatpush.msra.mxu0 0.0
    %74 = vmatpush.msra.mxu0 0.0
    %75 = vmatpush.msra.mxu0 0.0
    %76 = vmatpush.msra.mxu0 0.0
    %77 = vmatpush.msra.mxu0 %v54
    %78 = vmatpush.msra.mxu0 %v53
    %79 = vmatmul.f32.gmra.mxu0 %v61
    %v80 = vpop.f32.mrf.mxu0
    %v81 = vadd.f32 %v57, %v80
    %82 = vdwg.mxu0
    %v83 = vmax.f32 %v81, 0.0
    %v84 = vld [vmem:[%s3] sm:$0x1]
    %v86 = vperm.slane %v84, 0
    %v88 = vmul.f32 %v83, %v86
    %vm89 = vcmask 261120
    %v90 = vsel %vm89, %v88, 0.0
    %91 = vadd.xlane.f32.xlu0 %v90
    %v92 = vpop.xlane.xlu0 %91
    %v93 = vld [vmem:[#allocation2] sm:$0x1]
    %v95 = vperm.slane %v93, 0
    %v97 = vadd.f32 %v92, %v95
    %v98 = vxor.u32 %v97, 2147483648
    %v99 = vmul.f32 %v98, 1.442695
    %v100 = vpow.pop %v99
    %v101 = vadd.f32 %v100, 1.0
    %v102 = vrcp.pop %v101
    %v103 = vmul.f32 %v101, %v102
    %v104 = vsub.f32 1.0, %v103
    %v105 = vmul.f32 %v102, %v104
    %v106 = vadd.f32 %v102, %v105
    %vm107 = vweird.f32 %v101
    %vm108 = vweird.f32 %v102
    %vm109 = vmor %vm107, %vm108
    %v110 = vsel %vm109, %v102, %v106
    %v111 = vand.u32 2147483647, %v101
    %vm112 = vcmp.eq.f32.partialorder %v111, 8.507059e+37
    %v113 = vand.u32 %v101, 2147483648
    %v114 = vor.u32 1.1754944e-38, %v113
    %v115 = vsel %vm112, %v114, %v110
    %v116 = vmul.f32 1.0, %v115
    %vm117 = vcmask 7168
    %118 = vst.msk [vmem:[%s5] sm:$0xff] %vm117, %v116
    // Predicated region
    $region30: #{tpu_custom_call.1} parent=1 // pred_check
      _
    $region31: #{tpu_custom_call.1} parent=1 // pred_check_branch
      %120 = sbr.rel (0) target = $region33
    $region32: #{tpu_custom_call.1} parent=1 // pred_region
      _
    $region33: #{tpu_custom_call.1} parent=1 // pred_fallthru
      _
    // Predicated region
    $region34: #{tpu_custom_call.1} parent=1 // pred_check
      _
    $region35: #{tpu_custom_call.1} parent=1 // pred_check_branch
      %122 = sbr.rel (0) target = $region37
    $region36: #{tpu_custom_call.1} parent=1 // pred_region
      _
    $region37: #{tpu_custom_call.1} parent=1 // pred_fallthru
      _
    %123 = vsyncpa [#allocation4], 1
    %124 = vsyncpa [#allocation6], 1

</llo_original>
